<compile_context>
chip_gen: v5e
topology: v5e:2x2
jax: 0.10.0
libtpu: 0.0.40
codegen_flags: <defaults>
</compile_context>

<pallas_src>
import jax
import jax.numpy as jnp
from jax.experimental import pallas as pl
from jax.experimental.pallas import tpu as pltpu


def _round_up(n, m):
    return ((n + m - 1) // m) * m


def _tpu_chip_info():
    """Best-effort (physical VMEM bytes, TensorCores per chip) query."""
    vmem_cap = 64 * 1024 * 1024          # conservative default (v7x has the smallest VMEM)
    num_tc = 1
    try:
        info = pltpu.get_tpu_info()
        cap = getattr(info, "vmem_capacity_bytes", None)
        if cap:
            vmem_cap = int(cap)
        for attr in ("num_tensorcores", "tensorcore_count", "num_cores",
                     "cores_per_chip", "core_count"):
            val = getattr(info, attr, None)
            if val:
                num_tc = max(1, min(int(val), 4))
                break
    except Exception:
        pass
    try:
        kind = jax.devices()[0].device_kind.lower()
        if "v7" in kind or "7x" in kind:
            num_tc = max(num_tc, 2)
    except Exception:
        pass
    return vmem_cap, num_tc


_TPU_VMEM_BYTES, _TPU_NUM_TENSORCORES = _tpu_chip_info()


def _mul_kernel(w_ref, x_ref, o_ref):
    # w_ref is a (1,1) SMEM scalar; mixed-dtype multiply promotes (e.g. bf16*f32
    # computes in f32), then the result is cast to the promoted output dtype.
    o_ref[...] = (x_ref[...] * w_ref[0, 0]).astype(o_ref.dtype)


def _mul_2d_pallas(x2d, w_smem, out_dtype):
    """x2d: (rows, 128) lane-dense slab.  Returns (rows, 128) of out_dtype."""
    rows, lane = x2d.shape
    in_item = jnp.dtype(x2d.dtype).itemsize
    out_item = jnp.dtype(out_dtype).itemsize
    vmem_cap, num_tc = _TPU_VMEM_BYTES, _TPU_NUM_TENSORCORES

    # Native sublane packing granularity for the finest-packed dtype involved.
    sub = max(8, 32 // max(min(in_item, out_item), 1))

    # ~8 MiB combined (input + output) per grid step, for every dtype.
    bytes_per_row = lane * (in_item + out_item)
    target_block_bytes = 8 * 1024 * 1024
    cap_rows = max(sub, (target_block_bytes // bytes_per_row) // sub * sub)

    if rows <= sub or (num_tc <= 1 and rows <= cap_rows):
        # Single-TC chip (v5e/v6e) or tiny input: one full-extent block; a forced
        # 2-way split would be pure per-step overhead.
        tile_rows = rows
    elif num_tc >= 2:
        # Multi-TC chip (v7x): even, balanced block count so both TensorCores
        # finish together under dimension_semantics=("parallel",).
        n_blocks = _round_up(max(num_tc, pl.cdiv(rows, cap_rows)), num_tc)
        tile_rows = min(cap_rows, _round_up(pl.cdiv(rows, n_blocks), sub))
    else:
        tile_rows = cap_rows
    grid_n = pl.cdiv(rows, tile_rows)

    # Double-buffered in+out blocks plus headroom, capped at half of physical
    # VMEM (explicit guard for v7x's 64 MiB).
    block_bytes = tile_rows * bytes_per_row
    vmem_limit = int(min(max(2 * block_bytes + 8 * 1024 * 1024, 24 * 1024 * 1024),
                         vmem_cap // 2))
    vmem_limit = max(vmem_limit, 2 * block_bytes + 2 * 1024 * 1024)

    # TODO(synk): confirm in xprof that ("parallel",) actually shards the 1-D
    # grid across both v7x TensorCores; if not, switch to an explicit core split.
    return pl.pallas_call(
        _mul_kernel,
        out_shape=jax.ShapeDtypeStruct((rows, lane), out_dtype),
        grid=(grid_n,),
        in_specs=[
            pl.BlockSpec(memory_space=pltpu.MemorySpace.SMEM),
            pl.BlockSpec((tile_rows, lane), lambda i: (i, 0)),
        ],
        out_specs=pl.BlockSpec((tile_rows, lane), lambda i: (i, 0)),
        compiler_params=pltpu.CompilerParams(
            dimension_semantics=("parallel",),
            vmem_limit_bytes=vmem_limit,
        ),
    )(w_smem, x2d)


def _promoted_out_dtype(x_dtype, weight):
    """Match torch type-promotion for `tensor * scalar_weight`."""
    if isinstance(weight, bool) or isinstance(weight, int):
        return jnp.dtype(x_dtype)
    if isinstance(weight, float):
        return (jnp.dtype(x_dtype) if jnp.issubdtype(x_dtype, jnp.floating)
                else jnp.dtype(jnp.float32))
    return jnp.dtype(jnp.result_type(x_dtype, jnp.asarray(weight).dtype))


def mul_forward(x, weight):
    """Elementwise x * weight (scalar weight), computed in a Pallas TPU kernel."""
    # TODO(synk): non-scalar (broadcasting) weight tensors are not handled here.
    orig_shape = x.shape
    total = x.size
    out_dtype = _promoted_out_dtype(x.dtype, weight)

    # Weight travels through SMEM as a 32-bit scalar (native SMEM width).
    w_dtype = jnp.float32 if jnp.issubdtype(out_dtype, jnp.floating) else jnp.int32
    w = jnp.asarray(weight, dtype=w_dtype)

    if total == 0:
        return jnp.zeros(orig_shape, dtype=out_dtype)

    lane = 128
    x_flat = jnp.reshape(x, (-1,))
    bulk = (total // lane) * lane

    if bulk == 0:
        # Fewer than 128 elements: a standalone DMA kernel is pure overhead.
        return jnp.reshape((x_flat * w).astype(out_dtype), orig_shape)

    if bulk == total:
        x2d = jnp.reshape(x_flat, (total // lane, lane))        # free reshape
    else:
        x2d = jnp.reshape(x_flat[:bulk], (bulk // lane, lane))

    out2d = _mul_2d_pallas(x2d, w.reshape(1, 1), out_dtype)
    out_bulk = jnp.reshape(out2d, (-1,))

    if bulk == total:
        return jnp.reshape(out_bulk, orig_shape)

    # Rare non-divisible case: handle the <128-element tail with plain jnp and
    # stitch it on, instead of padding + slicing the whole tensor (which cost
    # ~3x the minimal HBM traffic).
    # TODO(synk): a fully fused masked-store tail would need manual DMA.
    tail = (x_flat[bulk:] * w).astype(out_dtype)
    return jnp.reshape(jnp.concatenate([out_bulk, tail]), orig_shape)


if __name__ == "__main__":
    key = jax.random.PRNGKey(0)

    # Small NCHW input consistent with an image-model tensor.
    x = jax.random.normal(key, (2, 4, 16, 16), dtype=jnp.float32)
    weight = 0.5                                  # Mul.__init__ scalar weight
    ref = x * weight

    # Path 1: Python-float weight (still routed through SMEM -> no recompiles).
    out = jax.block_until_ready(mul_forward(x, weight))
    assert out.shape == ref.shape and out.dtype == ref.dtype
    assert jnp.allclose(out, ref, atol=1e-6), "python-float weight path mismatch"

    # Path 2: traced f32 scalar weight (SMEM operand).
    out2 = jax.block_until_ready(mul_forward(x, jnp.float32(0.5)))
    assert jnp.allclose(out2, ref, atol=1e-6), "array-weight path mismatch"

    # Path 3: bf16 x with an f32 tensor weight -> promoted f32 output (torch semantics).
    xb = x.astype(jnp.bfloat16)
    out3 = jax.block_until_ready(mul_forward(xb, jnp.float32(0.5)))
    assert out3.dtype == jnp.float32
    assert jnp.allclose(out3, xb.astype(jnp.float32) * 0.5, atol=1e-6), "promotion mismatch"

    # Path 4: bf16 x with a Python-float weight -> bf16 output (torch semantics).
    out4 = jax.block_until_ready(mul_forward(xb, 0.5))
    assert out4.dtype == jnp.bfloat16
    assert jnp.allclose(out4.astype(jnp.float32),
                        (xb.astype(jnp.float32) * 0.5), atol=1e-6), "bf16 path mismatch"

    # Path 5: size not divisible by 128 -> bulk kernel + jnp tail (no full pad/slice).
    x5 = jax.random.normal(jax.random.PRNGKey(1), (5, 7, 9), dtype=jnp.float32)
    out5 = jax.block_until_ready(mul_forward(x5, weight))
    assert jnp.allclose(out5, x5 * weight, atol=1e-6), "bulk+tail path mismatch"

    # Path 6: fewer than 128 elements -> pure jnp fallback.
    x6 = jax.random.normal(jax.random.PRNGKey(2), (3, 5, 7), dtype=jnp.float32)
    out6 = jax.block_until_ready(mul_forward(x6, weight))
    assert jnp.allclose(out6, x6 * weight, atol=1e-6), "tiny-input path mismatch"

    print("KERNEL_OK")
</pallas_src>

<mosaic_0001>
module attributes {stable_mosaic.version = 11 : i64} {
  func.func @_mul_kernel(%arg0: i32, %arg1: memref<1x1xf32, #tpu.memory_space<smem>>, %arg2: memref<16x128xf32, #tpu.memory_space<vmem>>, %arg3: memref<16x128xf32, #tpu.memory_space<vmem>>) attributes {dimension_semantics = [#tpu.dimension_semantics<parallel>], iteration_bounds = array<i64: 1>, scalar_prefetch = 0 : i64, scratch_operands = 0 : i64, tpu.core_type = #tpu.core_type<tc>, window_params = [{transform_indices = @transform_0, window_bounds = array<i64: 1, 1>}, {transform_indices = @transform_1, window_bounds = array<i64: 16, 128>}, {transform_indices = @transform_2, window_bounds = array<i64: 16, 128>}]} {
    %c0 = arith.constant 0 : index
    %c0_0 = arith.constant 0 : index
    %0 = vector.load %arg2[%c0, %c0_0] : memref<16x128xf32, #tpu.memory_space<vmem>>, vector<16x128xf32>
    %c0_1 = arith.constant 0 : index
    %c0_2 = arith.constant 0 : index
    %1 = memref.load %arg1[%c0_1, %c0_2] : memref<1x1xf32, #tpu.memory_space<smem>>
    %2 = vector.broadcast %1 : f32 to vector<16x128xf32>
    %3 = arith.mulf %0, %2 : vector<16x128xf32>
    %c0_3 = arith.constant 0 : index
    %c0_4 = arith.constant 0 : index
    %4 = vector.load %arg3[%c0_3, %c0_4] : memref<16x128xf32, #tpu.memory_space<vmem>>, vector<16x128xf32>
    tpu.vector_store %arg3[%c0_3, %c0_4], %3 {strides = array<i32>} : memref<16x128xf32, #tpu.memory_space<vmem>>, vector<16x128xf32>,
    return
  }
  func.func @transform_0(%arg0: i32) -> (i32, i32) {
    %c0_i32 = arith.constant 0 : i32
    %c0_i32_0 = arith.constant 0 : i32
    %c0_i32_1 = arith.constant 0 : i32
    return %c0_i32, %c0_i32_0 : i32, i32
  }
  func.func @transform_1(%arg0: i32) -> (i32, i32) {
    %c0_i32 = arith.constant 0 : i32
    %c0_i32_0 = arith.constant 0 : i32
    return %arg0, %c0_i32 : i32, i32
  }
  func.func @transform_2(%arg0: i32) -> (i32, i32) {
    %c0_i32 = arith.constant 0 : i32
    %c0_i32_0 = arith.constant 0 : i32
    return %arg0, %c0_i32 : i32, i32
  }
}

</mosaic_0001>

<llo_original>
// kernel: tpu_custom_call.1
$region0: #{tpu_custom_call.1}
  #allocation0 [shape = 'u32[]', space=smem, size = 0x4, offset = 0x4, fixed_abs, tag = 'smem constant byte address 0x4 - core index']
  #allocation1 [shape = 'u32[72,128]{1,0:T(1,128)}', space=vmem, size = 0x9000, scoped, tag = 'internal scratch']
  #allocation2 [shape = 'f32[1,1]{1,0:T(1,128)S(6)}', space=smem, size = 0x200, scoped, tag = 'scoped memory for tpu_custom_call.1']
  %s0 = inlined_call_operand.<no memory space> [shape: f32[1,1], index: 0, kind: input, shape index: {}]
  %s1 = inlined_call_operand.hbm [shape: f32[16,128], index: 1, kind: input, shape index: {}]
  %s2 = inlined_call_operand.hbm [shape: f32[16,128], index: 2, kind: output, shape index: {}]
  %s3 = sld [smem:[#allocation0]]
  $region22: #{tpu_custom_call.1} parent=0
    _
  %s5 = ssub.s32 1, %s3
  %s6 = scalar_select 0, %s5, %s3
  %7 = sst [smem:[#allocation2]] %s0
  $region1: #{tpu_custom_call.1} parent=0
    #allocation3 [shape = 'u8[8192]{0}', space=vmem, size = 0x2000, scoped, tag = 'input window, operand 1, single buffered']
    #allocation4 [shape = 's32[1]{0}', space=sflag, size = 0x4, scoped, tag = 'scoped memory for tpu_custom_call.1']
    #allocation5 [shape = 's32[1]{0}', space=sflag, size = 0x4, scoped, tag = 'scoped memory for tpu_custom_call.1']
    #allocation6 [shape = 'u8[8192]{0}', space=vmem, size = 0x2000, scoped, tag = 'output window, operand 0, single buffered']
    %8 = vsyncpa [#allocation4], 0
    %9 = vsyncpa [#allocation5], 0
    // Predicated region
    $region2: #{tpu_custom_call.1} parent=1 // pred_check
      _
    $region3: #{tpu_custom_call.1} parent=1 // pred_check_branch
      %11 = sbr.rel (0) target = $region5
    $region4: #{tpu_custom_call.1} parent=1 // pred_region
      _
    $region5: #{tpu_custom_call.1} parent=1 // pred_fallthru
      _
    // Predicated region
    $region6: #{tpu_custom_call.1} parent=1 // pred_check
      _
    $region7: #{tpu_custom_call.1} parent=1 // pred_check_branch
      %13 = sbr.rel (0) target = $region9
    $region8: #{tpu_custom_call.1} parent=1 // pred_region
      %15 = vsyncadd [#allocation4], 0
      %s16 = sshll.u32 %s1, 4
      %s17 = int_to_ptr.hbm [resolvable:$true] %s16
      %s18 = sshll.u32 [#allocation3], 4
      %s19 = int_to_ptr.vmem [resolvable:$true] %s18
      %24 = dma.hbm_to_vmem [thread:$0]  %s17, 256, %s19, [#allocation4], 128, 128, 8
    $region9: #{tpu_custom_call.1} parent=1 // pred_fallthru
      _
    // Predicated region
    $region10: #{tpu_custom_call.1} parent=1 // pred_check
      _
    $region11: #{tpu_custom_call.1} parent=1 // pred_check_branch
      %26 = sbr.rel (0) target = $region13
    $region12: #{tpu_custom_call.1} parent=1 // pred_region
      %28 = dma.done [#allocation4], 256
    $region13: #{tpu_custom_call.1} parent=1 // pred_fallthru
      _
    %v29 = vld [vmem:[#allocation3] sm:$0xff]
    %v30 = vld [vmem:[#allocation3 + $0x8] sm:$0xff]
    %s31 = sld [smem:[#allocation2]]
    %v32 = vstv %s31
    %v33 = vmul.f32 %v29, %v32
    %v34 = vmul.f32 %v30, %v32
    %35 = vst [vmem:[#allocation6] sm:$0xff] %v33
    %36 = vst [vmem:[#allocation6 + $0x8] sm:$0xff] %v34
    // Predicated region
    $region14: #{tpu_custom_call.1} parent=1 // pred_check
      _
    $region15: #{tpu_custom_call.1} parent=1 // pred_check_branch
      %38 = sbr.rel (0) target = $region17
    $region16: #{tpu_custom_call.1} parent=1 // pred_region
      %40 = vsyncadd [#allocation5], 0
      %s41 = sshll.u32 [#allocation6], 4
      %s42 = int_to_ptr.vmem [resolvable:$true] %s41
      %s43 = sshll.u32 %s2, 4
      %s44 = int_to_ptr.hbm [resolvable:$true] %s43
      %49 = dma.vmem_to_hbm [thread:$0]  %s42, 256, %s44, [#allocation5], 128, 128, 8
    $region17: #{tpu_custom_call.1} parent=1 // pred_fallthru
      _
    // Predicated region
    $region18: #{tpu_custom_call.1} parent=1 // pred_check
      _
    $region19: #{tpu_custom_call.1} parent=1 // pred_check_branch
      %51 = sbr.rel (0) target = $region21
    $region20: #{tpu_custom_call.1} parent=1 // pred_region
      %53 = dma.done [#allocation5], 256
    $region21: #{tpu_custom_call.1} parent=1 // pred_fallthru
      _
    %54 = vsyncpa [#allocation4], 1
    %55 = vsyncpa [#allocation5], 1

</llo_original>
